<compile_context>
chip_gen: v7x
topology: tpu7x:2x2x1
jax: 0.10.0
libtpu: 0.0.40
codegen_flags: <defaults>
</compile_context>

<pallas_src>
import jax
import jax.numpy as jnp
import numpy as np
from jax.experimental import pallas as pl
from jax.experimental.pallas import tpu as pltpu

# Small, module-consistent shapes.
B, L, E = 2, 16, 32          # batch, seq_len, embeddings_dim
K = 9                        # conv kernel_size
PAD = K // 2
LP = L + 2 * PAD             # padded sequence length
HID = 512                    # hidden width of the output MLP (fixed in __init__)
OUT = 4                      # output_dim


def light_attention_kernel(xp_ref, wcat_ref, bcat_ref, w1_ref, b1_ref,
                           w2t_ref, b2_ref, out_ref):
    """Single invocation, whole problem in VMEM.

    xp_ref  : (B, LP, E)    zero-padded input, sequence on sublanes
    wcat_ref: (K*E, 2E)     stacked conv weights; col j<E feature, j>=E attention
    bcat_ref: (1, 2E)       stacked conv biases
    w1_ref  : (2E, HID)     first linear (in x out)
    b1_ref  : (1, HID)
    w2t_ref : (OUT, HID)    second linear, lane-dense (out x in)
    b2_ref  : (1, OUT)
    out_ref : (B, OUT)
    """
    # --- im2col: patch[b*L + t, k*E + cin] = xpad[b, t + k, cin] -------------
    # Static sublane-offset slices of the padded input, concatenated along
    # lanes (taps) and sublanes (batch).  No lane-rotating per-tap matmuls.
    row_blocks = []
    for b in range(B):
        taps = [xp_ref[b, k:k + L, :] for k in range(K)]        # K x [L, E]
        row_blocks.append(jnp.concatenate(taps, axis=1))        # [L, K*E]
    patch = jnp.concatenate(row_blocks, axis=0)                 # [B*L, K*E]

    # --- both convolutions as ONE MXU matmul (bias fused as a broadcast add) -
    conv = jnp.dot(patch, wcat_ref[...],
                   preferred_element_type=jnp.float32) + bcat_ref[...]  # [B*L, 2E]

    # NOTE: self.dropout / MLP dropout are identity in eval mode.

    # --- per-batch softmax over the sequence axis + pooled features ----------
    cat_rows = []
    for b in range(B):
        o_b = conv[b * L:(b + 1) * L, 0:E]                      # [L, E]
        a_b = conv[b * L:(b + 1) * L, E:2 * E]                  # [L, E]
        a_b = a_b - jnp.max(a_b, axis=0, keepdims=True)
        p_b = jnp.exp(a_b)
        inv = pl.reciprocal(jnp.sum(p_b, axis=0, keepdims=True), approx=False)
        p_b = p_b * inv
        o1 = jnp.sum(o_b * p_b, axis=0, keepdims=True)          # [1, E]
        o2 = jnp.max(o_b, axis=0, keepdims=True)                # [1, E]
        cat_rows.append(jnp.concatenate([o1, o2], axis=1))      # [1, 2E]
    cat = jnp.concatenate(cat_rows, axis=0)                     # [B, 2E]

    # --- MLP head: one matmul per layer, M = B --------------------------------
    h = jnp.dot(cat, w1_ref[...],
                preferred_element_type=jnp.float32) + b1_ref[...]       # [B, HID]
    h = jnp.maximum(h, 0.0)
    out = jax.lax.dot_general(h, w2t_ref[...], (((1,), (1,)), ((), ())),
                              preferred_element_type=jnp.float32) + b2_ref[...]
    out_ref[...] = out                                          # [B, OUT]


def light_attention_forward(x, params):
    """x: [B, L, E] float32 -> logits [B, OUT]."""
    wf, bf, wa, ba, w1, b1, w2, b2 = params

    # glue: zero-pad the sequence axis (sequence stays on the sublane axis).
    xp = jnp.pad(x, ((0, 0), (PAD, PAD), (0, 0)))               # [B, LP, E]

    # Stack both conv weights into one [K*E, 2E] matrix whose row index is
    # k*E + cin (matching the im2col column order) and column is the output
    # channel (feature block then attention block).
    wf_r = jnp.transpose(wf, (2, 1, 0)).reshape(K * E, E)       # [K*E, E]
    wa_r = jnp.transpose(wa, (2, 1, 0)).reshape(K * E, E)
    wcat = jnp.concatenate([wf_r, wa_r], axis=1)                # [K*E, 2E]
    bcat = jnp.concatenate([bf, ba]).reshape(1, 2 * E)

    w2t = jnp.transpose(w2, (1, 0))                             # [OUT, HID] lane-dense

    out = pl.pallas_call(
        light_attention_kernel,
        out_shape=jax.ShapeDtypeStruct((B, OUT), jnp.float32),
        grid_spec=pltpu.PrefetchScalarGridSpec(
            num_scalar_prefetch=0,
            grid=(1,),
            in_specs=[
                pl.BlockSpec((B, LP, E), lambda i: (0, 0, 0)),
                pl.BlockSpec((K * E, 2 * E), lambda i: (0, 0)),
                pl.BlockSpec((1, 2 * E), lambda i: (0, 0)),
                pl.BlockSpec((2 * E, HID), lambda i: (0, 0)),
                pl.BlockSpec((1, HID), lambda i: (0, 0)),
                pl.BlockSpec((OUT, HID), lambda i: (0, 0)),
                pl.BlockSpec((1, OUT), lambda i: (0, 0)),
            ],
            out_specs=pl.BlockSpec((B, OUT), lambda i: (0, 0)),
        ),
        compiler_params=pltpu.CompilerParams(
            dimension_semantics=("arbitrary",)),
    )(xp, wcat, bcat, w1, b1.reshape(1, HID), w2t, b2.reshape(1, OUT))
    return out


def ref_forward(x, params):
    """Pure-JAX reference matching the PyTorch forward (eval mode)."""
    wf, bf, wa, ba, w1, b1, w2, b2 = params
    xt = jnp.transpose(x, (0, 2, 1))                            # [B, E, L]

    def conv(w, b):
        y = jax.lax.conv_general_dilated(
            xt, w, window_strides=(1,), padding=[(PAD, PAD)],
            dimension_numbers=('NCH', 'OIH', 'NCH'))
        return y + b[None, :, None]

    o = conv(wf, bf)
    att = conv(wa, ba)
    p = jax.nn.softmax(att, axis=-1)
    o1 = jnp.sum(o * p, axis=-1)
    o2 = jnp.max(o, axis=-1)
    cat = jnp.concatenate([o1, o2], axis=-1)                    # [B, 2E]
    h = jnp.maximum(cat @ w1 + b1, 0.0)
    return h @ w2 + b2


if __name__ == "__main__":
    key = jax.random.PRNGKey(0)
    ks = jax.random.split(key, 9)

    x = jax.random.normal(ks[0], (B, L, E), jnp.float32)

    # deterministic synthetic parameters (shapes from __init__; PyTorch linear
    # weights [out,in] are stored here pre-transposed as [in,out]).
    wf = jax.random.normal(ks[1], (E, E, K), jnp.float32) * 0.05
    bf = jax.random.normal(ks[2], (E,), jnp.float32) * 0.05
    wa = jax.random.normal(ks[3], (E, E, K), jnp.float32) * 0.05
    ba = jax.random.normal(ks[4], (E,), jnp.float32) * 0.05
    w1 = jax.random.normal(ks[5], (2 * E, HID), jnp.float32) * 0.05
    b1 = jax.random.normal(ks[6], (HID,), jnp.float32) * 0.05
    w2 = jax.random.normal(ks[7], (HID, OUT), jnp.float32) * 0.05
    b2 = jax.random.normal(ks[8], (OUT,), jnp.float32) * 0.05
    params = (wf, bf, wa, ba, w1, b1, w2, b2)

    out = jax.block_until_ready(light_attention_forward(x, params))
    ref = jax.block_until_ready(ref_forward(x, params))
    np.testing.assert_allclose(np.asarray(out), np.asarray(ref),
                               rtol=2e-4, atol=2e-4)
    print("KERNEL_OK")
</pallas_src>

<mosaic_0001>
module attributes {stable_mosaic.version = 11 : i64} {
  func.func @light_attention_kernel(%arg0: i32, %arg1: memref<2x24x32xf32, #tpu.memory_space<vmem>>, %arg2: memref<288x64xf32, #tpu.memory_space<vmem>>, %arg3: memref<1x64xf32, #tpu.memory_space<vmem>>, %arg4: memref<64x512xf32, #tpu.memory_space<vmem>>, %arg5: memref<1x512xf32, #tpu.memory_space<vmem>>, %arg6: memref<4x512xf32, #tpu.memory_space<vmem>>, %arg7: memref<1x4xf32, #tpu.memory_space<vmem>>, %arg8: memref<2x4xf32, #tpu.memory_space<vmem>>) attributes {dimension_semantics = [#tpu.dimension_semantics<arbitrary>], iteration_bounds = array<i64: 1>, scalar_prefetch = 0 : i64, scratch_operands = 0 : i64, tpu.core_type = #tpu.core_type<tc>, window_params = [{pipeline_mode = #tpu.pipeline_mode<synchronous>, transform_indices = @transform_0, window_bounds = array<i64: 2, 24, 32>}, {pipeline_mode = #tpu.pipeline_mode<synchronous>, transform_indices = @transform_1, window_bounds = array<i64: 288, 64>}, {pipeline_mode = #tpu.pipeline_mode<synchronous>, transform_indices = @transform_2, window_bounds = array<i64: 1, 64>}, {pipeline_mode = #tpu.pipeline_mode<synchronous>, transform_indices = @transform_3, window_bounds = array<i64: 64, 512>}, {pipeline_mode = #tpu.pipeline_mode<synchronous>, transform_indices = @transform_4, window_bounds = array<i64: 1, 512>}, {pipeline_mode = #tpu.pipeline_mode<synchronous>, transform_indices = @transform_5, window_bounds = array<i64: 4, 512>}, {pipeline_mode = #tpu.pipeline_mode<synchronous>, transform_indices = @transform_6, window_bounds = array<i64: 1, 4>}, {pipeline_mode = #tpu.pipeline_mode<synchronous>, transform_indices = @transform_7, window_bounds = array<i64: 2, 4>}]} {
    %c0 = arith.constant 0 : index
    %c0_0 = arith.constant 0 : index
    %c0_1 = arith.constant 0 : index
    %0 = vector.load %arg1[%c0, %c0_0, %c0_1] : memref<2x24x32xf32, #tpu.memory_space<vmem>>, vector<1x16x32xf32>
    %1 = vector.shape_cast %0 : vector<1x16x32xf32> to vector<16x32xf32>
    %c0_2 = arith.constant 0 : index
    %c1 = arith.constant 1 : index
    %c0_3 = arith.constant 0 : index
    %2 = vector.load %arg1[%c0_2, %c1, %c0_3] : memref<2x24x32xf32, #tpu.memory_space<vmem>>, vector<1x16x32xf32>
    %3 = vector.shape_cast %2 : vector<1x16x32xf32> to vector<16x32xf32>
    %c0_4 = arith.constant 0 : index
    %c2 = arith.constant 2 : index
    %c0_5 = arith.constant 0 : index
    %4 = vector.load %arg1[%c0_4, %c2, %c0_5] : memref<2x24x32xf32, #tpu.memory_space<vmem>>, vector<1x16x32xf32>
    %5 = vector.shape_cast %4 : vector<1x16x32xf32> to vector<16x32xf32>
    %c0_6 = arith.constant 0 : index
    %c3 = arith.constant 3 : index
    %c0_7 = arith.constant 0 : index
    %6 = vector.load %arg1[%c0_6, %c3, %c0_7] : memref<2x24x32xf32, #tpu.memory_space<vmem>>, vector<1x16x32xf32>
    %7 = vector.shape_cast %6 : vector<1x16x32xf32> to vector<16x32xf32>
    %c0_8 = arith.constant 0 : index
    %c4 = arith.constant 4 : index
    %c0_9 = arith.constant 0 : index
    %8 = vector.load %arg1[%c0_8, %c4, %c0_9] : memref<2x24x32xf32, #tpu.memory_space<vmem>>, vector<1x16x32xf32>
    %9 = vector.shape_cast %8 : vector<1x16x32xf32> to vector<16x32xf32>
    %c0_10 = arith.constant 0 : index
    %c5 = arith.constant 5 : index
    %c0_11 = arith.constant 0 : index
    %10 = vector.load %arg1[%c0_10, %c5, %c0_11] : memref<2x24x32xf32, #tpu.memory_space<vmem>>, vector<1x16x32xf32>
    %11 = vector.shape_cast %10 : vector<1x16x32xf32> to vector<16x32xf32>
    %c0_12 = arith.constant 0 : index
    %c6 = arith.constant 6 : index
    %c0_13 = arith.constant 0 : index
    %12 = vector.load %arg1[%c0_12, %c6, %c0_13] : memref<2x24x32xf32, #tpu.memory_space<vmem>>, vector<1x16x32xf32>
    %13 = vector.shape_cast %12 : vector<1x16x32xf32> to vector<16x32xf32>
    %c0_14 = arith.constant 0 : index
    %c7 = arith.constant 7 : index
    %c0_15 = arith.constant 0 : index
    %14 = vector.load %arg1[%c0_14, %c7, %c0_15] : memref<2x24x32xf32, #tpu.memory_space<vmem>>, vector<1x16x32xf32>
    %15 = vector.shape_cast %14 : vector<1x16x32xf32> to vector<16x32xf32>
    %c0_16 = arith.constant 0 : index
    %c8 = arith.constant 8 : index
    %c0_17 = arith.constant 0 : index
    %16 = vector.load %arg1[%c0_16, %c8, %c0_17] : memref<2x24x32xf32, #tpu.memory_space<vmem>>, vector<1x16x32xf32>
    %17 = vector.shape_cast %16 : vector<1x16x32xf32> to vector<16x32xf32>
    %18 = tpu.concatenate %1, %3, %5, %7, %9, %11, %13, %15, %17 in 1 : vector<16x32xf32>, vector<16x32xf32>, vector<16x32xf32>, vector<16x32xf32>, vector<16x32xf32>, vector<16x32xf32>, vector<16x32xf32>, vector<16x32xf32>, vector<16x32xf32> -> vector<16x288xf32>
    %c1_18 = arith.constant 1 : index
    %c0_19 = arith.constant 0 : index
    %c0_20 = arith.constant 0 : index
    %19 = vector.load %arg1[%c1_18, %c0_19, %c0_20] : memref<2x24x32xf32, #tpu.memory_space<vmem>>, vector<1x16x32xf32>
    %20 = vector.shape_cast %19 : vector<1x16x32xf32> to vector<16x32xf32>
    %c1_21 = arith.constant 1 : index
    %c1_22 = arith.constant 1 : index
    %c0_23 = arith.constant 0 : index
    %21 = vector.load %arg1[%c1_21, %c1_22, %c0_23] : memref<2x24x32xf32, #tpu.memory_space<vmem>>, vector<1x16x32xf32>
    %22 = vector.shape_cast %21 : vector<1x16x32xf32> to vector<16x32xf32>
    %c1_24 = arith.constant 1 : index
    %c2_25 = arith.constant 2 : index
    %c0_26 = arith.constant 0 : index
    %23 = vector.load %arg1[%c1_24, %c2_25, %c0_26] : memref<2x24x32xf32, #tpu.memory_space<vmem>>, vector<1x16x32xf32>
    %24 = vector.shape_cast %23 : vector<1x16x32xf32> to vector<16x32xf32>
    %c1_27 = arith.constant 1 : index
    %c3_28 = arith.constant 3 : index
    %c0_29 = arith.constant 0 : index
    %25 = vector.load %arg1[%c1_27, %c3_28, %c0_29] : memref<2x24x32xf32, #tpu.memory_space<vmem>>, vector<1x16x32xf32>
    %26 = vector.shape_cast %25 : vector<1x16x32xf32> to vector<16x32xf32>
    %c1_30 = arith.constant 1 : index
    %c4_31 = arith.constant 4 : index
    %c0_32 = arith.constant 0 : index
    %27 = vector.load %arg1[%c1_30, %c4_31, %c0_32] : memref<2x24x32xf32, #tpu.memory_space<vmem>>, vector<1x16x32xf32>
    %28 = vector.shape_cast %27 : vector<1x16x32xf32> to vector<16x32xf32>
    %c1_33 = arith.constant 1 : index
    %c5_34 = arith.constant 5 : index
    %c0_35 = arith.constant 0 : index
    %29 = vector.load %arg1[%c1_33, %c5_34, %c0_35] : memref<2x24x32xf32, #tpu.memory_space<vmem>>, vector<1x16x32xf32>
    %30 = vector.shape_cast %29 : vector<1x16x32xf32> to vector<16x32xf32>
    %c1_36 = arith.constant 1 : index
    %c6_37 = arith.constant 6 : index
    %c0_38 = arith.constant 0 : index
    %31 = vector.load %arg1[%c1_36, %c6_37, %c0_38] : memref<2x24x32xf32, #tpu.memory_space<vmem>>, vector<1x16x32xf32>
    %32 = vector.shape_cast %31 : vector<1x16x32xf32> to vector<16x32xf32>
    %c1_39 = arith.constant 1 : index
    %c7_40 = arith.constant 7 : index
    %c0_41 = arith.constant 0 : index
    %33 = vector.load %arg1[%c1_39, %c7_40, %c0_41] : memref<2x24x32xf32, #tpu.memory_space<vmem>>, vector<1x16x32xf32>
    %34 = vector.shape_cast %33 : vector<1x16x32xf32> to vector<16x32xf32>
    %c1_42 = arith.constant 1 : index
    %c8_43 = arith.constant 8 : index
    %c0_44 = arith.constant 0 : index
    %35 = vector.load %arg1[%c1_42, %c8_43, %c0_44] : memref<2x24x32xf32, #tpu.memory_space<vmem>>, vector<1x16x32xf32>
    %36 = vector.shape_cast %35 : vector<1x16x32xf32> to vector<16x32xf32>
    %37 = tpu.concatenate %20, %22, %24, %26, %28, %30, %32, %34, %36 in 1 : vector<16x32xf32>, vector<16x32xf32>, vector<16x32xf32>, vector<16x32xf32>, vector<16x32xf32>, vector<16x32xf32>, vector<16x32xf32>, vector<16x32xf32>, vector<16x32xf32> -> vector<16x288xf32>
    %38 = tpu.concatenate %18, %37 in 0 : vector<16x288xf32>, vector<16x288xf32> -> vector<32x288xf32>
    %c0_45 = arith.constant 0 : index
    %c0_46 = arith.constant 0 : index
    %39 = vector.load %arg2[%c0_45, %c0_46] : memref<288x64xf32, #tpu.memory_space<vmem>>, vector<288x64xf32>
    %cst = arith.constant dense<0.000000e+00> : vector<32x64xf32>
    %40 = tpu.matmul %38, %39, %cst {dimension_numbers = #tpu.dot_dimension_numbers<[1], [0], [0], [1], [0, 0, 1, 1], [], []>} : vector<32x288xf32>, vector<288x64xf32>, vector<32x64xf32> -> vector<32x64xf32>
    %c0_47 = arith.constant 0 : index
    %c0_48 = arith.constant 0 : index
    %41 = vector.load %arg3[%c0_47, %c0_48] : memref<1x64xf32, #tpu.memory_space<vmem>>, vector<1x64xf32>
    %42 = vector.broadcast %41 : vector<1x64xf32> to vector<32x64xf32>
    %43 = arith.addf %40, %42 : vector<32x64xf32>
    %44 = vector.extract_strided_slice %43 {offsets = [0, 0], sizes = [16, 32], strides = [1, 1]} : vector<32x64xf32> to vector<16x32xf32>
    %45 = vector.extract_strided_slice %43 {offsets = [0, 32], sizes = [16, 32], strides = [1, 1]} : vector<32x64xf32> to vector<16x32xf32>
    %cst_49 = arith.constant dense<0xFF800000> : vector<32xf32>
    %46 = vector.multi_reduction <maximumf>, %45, %cst_49 [0] : vector<16x32xf32> to vector<32xf32>
    %47 = vector.shape_cast %46 : vector<32xf32> to vector<1x32xf32>
    %48 = vector.broadcast %47 : vector<1x32xf32> to vector<16x32xf32>
    %49 = arith.subf %45, %48 : vector<16x32xf32>
    %50 = math.exp %49 : vector<16x32xf32>
    %cst_50 = arith.constant dense<0.000000e+00> : vector<32xf32>
    %51 = vector.multi_reduction <add>, %50, %cst_50 [0] : vector<16x32xf32> to vector<32xf32>
    %52 = vector.shape_cast %51 : vector<32xf32> to vector<1x32xf32>
    %53 = tpu.reciprocal %52 : vector<1x32xf32> -> vector<1x32xf32>
    %54 = vector.broadcast %53 : vector<1x32xf32> to vector<16x32xf32>
    %55 = arith.mulf %50, %54 : vector<16x32xf32>
    %56 = arith.mulf %44, %55 : vector<16x32xf32>
    %cst_51 = arith.constant dense<0.000000e+00> : vector<32xf32>
    %57 = vector.multi_reduction <add>, %56, %cst_51 [0] : vector<16x32xf32> to vector<32xf32>
    %58 = vector.shape_cast %57 : vector<32xf32> to vector<1x32xf32>
    %cst_52 = arith.constant dense<0xFF800000> : vector<32xf32>
    %59 = vector.multi_reduction <maximumf>, %44, %cst_52 [0] : vector<16x32xf32> to vector<32xf32>
    %60 = vector.shape_cast %59 : vector<32xf32> to vector<1x32xf32>
    %61 = tpu.concatenate %58, %60 in 1 : vector<1x32xf32>, vector<1x32xf32> -> vector<1x64xf32>
    %62 = vector.extract_strided_slice %43 {offsets = [16, 0], sizes = [16, 32], strides = [1, 1]} : vector<32x64xf32> to vector<16x32xf32>
    %63 = vector.extract_strided_slice %43 {offsets = [16, 32], sizes = [16, 32], strides = [1, 1]} : vector<32x64xf32> to vector<16x32xf32>
    %cst_53 = arith.constant dense<0xFF800000> : vector<32xf32>
    %64 = vector.multi_reduction <maximumf>, %63, %cst_53 [0] : vector<16x32xf32> to vector<32xf32>
    %65 = vector.shape_cast %64 : vector<32xf32> to vector<1x32xf32>
    %66 = vector.broadcast %65 : vector<1x32xf32> to vector<16x32xf32>
    %67 = arith.subf %63, %66 : vector<16x32xf32>
    %68 = math.exp %67 : vector<16x32xf32>
    %cst_54 = arith.constant dense<0.000000e+00> : vector<32xf32>
    %69 = vector.multi_reduction <add>, %68, %cst_54 [0] : vector<16x32xf32> to vector<32xf32>
    %70 = vector.shape_cast %69 : vector<32xf32> to vector<1x32xf32>
    %71 = tpu.reciprocal %70 : vector<1x32xf32> -> vector<1x32xf32>
    %72 = vector.broadcast %71 : vector<1x32xf32> to vector<16x32xf32>
    %73 = arith.mulf %68, %72 : vector<16x32xf32>
    %74 = arith.mulf %62, %73 : vector<16x32xf32>
    %cst_55 = arith.constant dense<0.000000e+00> : vector<32xf32>
    %75 = vector.multi_reduction <add>, %74, %cst_55 [0] : vector<16x32xf32> to vector<32xf32>
    %76 = vector.shape_cast %75 : vector<32xf32> to vector<1x32xf32>
    %cst_56 = arith.constant dense<0xFF800000> : vector<32xf32>
    %77 = vector.multi_reduction <maximumf>, %62, %cst_56 [0] : vector<16x32xf32> to vector<32xf32>
    %78 = vector.shape_cast %77 : vector<32xf32> to vector<1x32xf32>
    %79 = tpu.concatenate %76, %78 in 1 : vector<1x32xf32>, vector<1x32xf32> -> vector<1x64xf32>
    %80 = tpu.concatenate %61, %79 in 0 : vector<1x64xf32>, vector<1x64xf32> -> vector<2x64xf32>
    %c0_57 = arith.constant 0 : index
    %c0_58 = arith.constant 0 : index
    %81 = vector.load %arg4[%c0_57, %c0_58] : memref<64x512xf32, #tpu.memory_space<vmem>>, vector<64x512xf32>
    %cst_59 = arith.constant dense<0.000000e+00> : vector<2x512xf32>
    %82 = tpu.matmul %80, %81, %cst_59 {dimension_numbers = #tpu.dot_dimension_numbers<[1], [0], [0], [1], [0, 0, 1, 1], [], []>} : vector<2x64xf32>, vector<64x512xf32>, vector<2x512xf32> -> vector<2x512xf32>
    %c0_60 = arith.constant 0 : index
    %c0_61 = arith.constant 0 : index
    %83 = vector.load %arg5[%c0_60, %c0_61] : memref<1x512xf32, #tpu.memory_space<vmem>>, vector<1x512xf32>
    %84 = vector.broadcast %83 : vector<1x512xf32> to vector<2x512xf32>
    %85 = arith.addf %82, %84 : vector<2x512xf32>
    %cst_62 = arith.constant 0.000000e+00 : f32
    %86 = vector.broadcast %cst_62 : f32 to vector<2x512xf32>
    %87 = arith.maximumf %85, %86 : vector<2x512xf32>
    %c0_63 = arith.constant 0 : index
    %c0_64 = arith.constant 0 : index
    %88 = vector.load %arg6[%c0_63, %c0_64] : memref<4x512xf32, #tpu.memory_space<vmem>>, vector<4x512xf32>
    %cst_65 = arith.constant dense<0.000000e+00> : vector<2x4xf32>
    %89 = tpu.matmul %87, %88, %cst_65 {dimension_numbers = #tpu.dot_dimension_numbers<[1], [1], [0], [0], [0, 0, 1, 0], [], []>} : vector<2x512xf32>, vector<4x512xf32>, vector<2x4xf32> -> vector<2x4xf32>
    %c0_66 = arith.constant 0 : index
    %c0_67 = arith.constant 0 : index
    %90 = vector.load %arg7[%c0_66, %c0_67] : memref<1x4xf32, #tpu.memory_space<vmem>>, vector<1x4xf32>
    %91 = vector.broadcast %90 : vector<1x4xf32> to vector<2x4xf32>
    %92 = arith.addf %89, %91 : vector<2x4xf32>
    %c0_68 = arith.constant 0 : index
    %c0_69 = arith.constant 0 : index
    %93 = vector.load %arg8[%c0_68, %c0_69] : memref<2x4xf32, #tpu.memory_space<vmem>>, vector<2x4xf32>
    tpu.vector_store %arg8[%c0_68, %c0_69], %92 {strides = array<i32>} : memref<2x4xf32, #tpu.memory_space<vmem>>, vector<2x4xf32>,
    return
  }
  func.func @transform_0(%arg0: i32) -> (i32, i32, i32) {
    %c0_i32 = arith.constant 0 : i32
    %c0_i32_0 = arith.constant 0 : i32
    %c0_i32_1 = arith.constant 0 : i32
    %c0_i32_2 = arith.constant 0 : i32
    return %c0_i32, %c0_i32_0, %c0_i32_1 : i32, i32, i32
  }
  func.func @transform_1(%arg0: i32) -> (i32, i32) {
    %c0_i32 = arith.constant 0 : i32
    %c0_i32_0 = arith.constant 0 : i32
    %c0_i32_1 = arith.constant 0 : i32
    return %c0_i32, %c0_i32_0 : i32, i32
  }
  func.func @transform_2(%arg0: i32) -> (i32, i32) {
    %c0_i32 = arith.constant 0 : i32
    %c0_i32_0 = arith.constant 0 : i32
    %c0_i32_1 = arith.constant 0 : i32
    return %c0_i32, %c0_i32_0 : i32, i32
  }
  func.func @transform_3(%arg0: i32) -> (i32, i32) {
    %c0_i32 = arith.constant 0 : i32
    %c0_i32_0 = arith.constant 0 : i32
    %c0_i32_1 = arith.constant 0 : i32
    return %c0_i32, %c0_i32_0 : i32, i32
  }
  func.func @transform_4(%arg0: i32) -> (i32, i32) {
    %c0_i32 = arith.constant 0 : i32
    %c0_i32_0 = arith.constant 0 : i32
    %c0_i32_1 = arith.constant 0 : i32
    return %c0_i32, %c0_i32_0 : i32, i32
  }
  func.func @transform_5(%arg0: i32) -> (i32, i32) {
    %c0_i32 = arith.constant 0 : i32
    %c0_i32_0 = arith.constant 0 : i32
    %c0_i32_1 = arith.constant 0 : i32
    return %c0_i32, %c0_i32_0 : i32, i32
  }
  func.func @transform_6(%arg0: i32) -> (i32, i32) {
    %c0_i32 = arith.constant 0 : i32
    %c0_i32_0 = arith.constant 0 : i32
    %c0_i32_1 = arith.constant 0 : i32
    return %c0_i32, %c0_i32_0 : i32, i32
  }
  func.func @transform_7(%arg0: i32) -> (i32, i32) {
    %c0_i32 = arith.constant 0 : i32
    %c0_i32_0 = arith.constant 0 : i32
    %c0_i32_1 = arith.constant 0 : i32
    return %c0_i32, %c0_i32_0 : i32, i32
  }
}

</mosaic_0001>

<llo_original>
// kernel: tpu_custom_call.1
$region0: #{tpu_custom_call.1}
  #allocation0 [shape = 'u32[]', space=smem, size = 0x4, offset = 0x4, fixed_abs, tag = 'smem constant byte address 0x4 - core index']
  #allocation1 [shape = 'u32[144,128]{1,0:T(1,128)}', space=vmem, size = 0x12000, scoped, tag = 'internal scratch']
  %s0 = inlined_call_operand.vmem [shape: f32[2,24,32], index: 0, kind: input, shape index: {}]
  %s1 = inlined_call_operand.vmem [shape: f32[288,64], index: 1, kind: input, shape index: {}]
  %s2 = inlined_call_operand.vmem [shape: f32[1,64], index: 2, kind: input, shape index: {}]
  %s3 = inlined_call_operand.vmem [shape: f32[64,512], index: 3, kind: input, shape index: {}]
  %s4 = inlined_call_operand.vmem [shape: f32[1,512], index: 4, kind: input, shape index: {}]
  %s5 = inlined_call_operand.vmem [shape: f32[4,512], index: 5, kind: input, shape index: {}]
  %s6 = inlined_call_operand.vmem [shape: f32[1,4], index: 6, kind: input, shape index: {}]
  %s7 = inlined_call_operand.hbm [shape: f32[2,4], index: 7, kind: output, shape index: {}]
  %s8 = sld [smem:[#allocation0]]
  $region38: #{tpu_custom_call.1} parent=0
    _
  %s10 = ssub.s32 1, %s8
  %s11 = scalar_select 0, %s10, %s8
  $region1: #{tpu_custom_call.1} parent=0
    #allocation2 [shape = 'u8[1024]{0}', space=vmem, size = 0x400, scoped, tag = 'output window, operand 0, single buffered']
    #allocation3 [shape = 's32[1]{0}', space=sflag, size = 0x4, scoped, tag = 'scoped memory for tpu_custom_call.1']
    %12 = vsyncpa [#allocation3], 0
    // Predicated region
    $region2: #{tpu_custom_call.1} parent=1 // pred_check
      _
    $region3: #{tpu_custom_call.1} parent=1 // pred_check_branch
      %14 = sbr.rel (0) target = $region5
    $region4: #{tpu_custom_call.1} parent=1 // pred_region
      _
    $region5: #{tpu_custom_call.1} parent=1 // pred_fallthru
      _
    // Predicated region
    $region6: #{tpu_custom_call.1} parent=1 // pred_check
      _
    $region7: #{tpu_custom_call.1} parent=1 // pred_check_branch
      %16 = sbr.rel (0) target = $region9
    $region8: #{tpu_custom_call.1} parent=1 // pred_region
      _
    $region9: #{tpu_custom_call.1} parent=1 // pred_fallthru
      _
    // Predicated region
    $region10: #{tpu_custom_call.1} parent=1 // pred_check
      _
    $region11: #{tpu_custom_call.1} parent=1 // pred_check_branch
      %18 = sbr.rel (0) target = $region13
    $region12: #{tpu_custom_call.1} parent=1 // pred_region
      _
    $region13: #{tpu_custom_call.1} parent=1 // pred_fallthru
      _
    // Predicated region
    $region14: #{tpu_custom_call.1} parent=1 // pred_check
      _
    $region15: #{tpu_custom_call.1} parent=1 // pred_check_branch
      %20 = sbr.rel (0) target = $region17
    $region16: #{tpu_custom_call.1} parent=1 // pred_region
      _
    $region17: #{tpu_custom_call.1} parent=1 // pred_fallthru
      _
    // Predicated region
    $region18: #{tpu_custom_call.1} parent=1 // pred_check
      _
    $region19: #{tpu_custom_call.1} parent=1 // pred_check_branch
      %22 = sbr.rel (0) target = $region21
    $region20: #{tpu_custom_call.1} parent=1 // pred_region
      _
    $region21: #{tpu_custom_call.1} parent=1 // pred_fallthru
      _
    // Predicated region
    $region22: #{tpu_custom_call.1} parent=1 // pred_check
      _
    $region23: #{tpu_custom_call.1} parent=1 // pred_check_branch
      %24 = sbr.rel (0) target = $region25
    $region24: #{tpu_custom_call.1} parent=1 // pred_region
      _
    $region25: #{tpu_custom_call.1} parent=1 // pred_fallthru
      _
    // Predicated region
    $region26: #{tpu_custom_call.1} parent=1 // pred_check
      _
    $region27: #{tpu_custom_call.1} parent=1 // pred_check_branch
      %26 = sbr.rel (0) target = $region29
    $region28: #{tpu_custom_call.1} parent=1 // pred_region
      _
    $region29: #{tpu_custom_call.1} parent=1 // pred_fallthru
      _
    %v27 = vld [vmem:[%s0] sm:$0xff]
    %v28 = vld [vmem:[%s0 + $0x8] sm:$0xff]
    %v29 = vld [vmem:[%s0 + $0x1] sm:$0xff]
    %v30 = vld [vmem:[%s0 + $0x9] sm:$0xff]
    %v31 = vld [vmem:[%s0 + $0x2] sm:$0xff]
    %v32 = vld [vmem:[%s0 + $0xa] sm:$0xff]
    %v33 = vld [vmem:[%s0 + $0x3] sm:$0xff]
    %v34 = vld [vmem:[%s0 + $0xb] sm:$0xff]
    %v35 = vld [vmem:[%s0 + $0x4] sm:$0xff]
    %v36 = vld [vmem:[%s0 + $0xc] sm:$0xff]
    %v37 = vld [vmem:[%s0 + $0x5] sm:$0xff]
    %v38 = vld [vmem:[%s0 + $0xd] sm:$0xff]
    %v39 = vld [vmem:[%s0 + $0x6] sm:$0xff]
    %v40 = vld [vmem:[%s0 + $0xe] sm:$0xff]
    %v41 = vld [vmem:[%s0 + $0x7] sm:$0xff]
    %v42 = vld [vmem:[%s0 + $0xf] sm:$0xff]
    %v43 = vld [vmem:[%s0 + $0x10] sm:$0xff]
    %46 = vrot.lane.b32.xlu0 %v29, 32
    %v47 = vpop.permute.xlu0 %46
    %48 = vrot.lane.b32.xlu0 %v30, 32
    %v49 = vpop.permute.xlu0 %48
    %54 = vrot.lane.b32.xlu0 %v31, 64
    %v55 = vpop.permute.xlu0 %54
    %56 = vrot.lane.b32.xlu0 %v32, 64
    %v57 = vpop.permute.xlu0 %56
    %62 = vrot.lane.b32.xlu0 %v33, 96
    %v63 = vpop.permute.xlu0 %62
    %64 = vrot.lane.b32.xlu0 %v34, 96
    %v65 = vpop.permute.xlu0 %64
    %70 = vrot.lane.b32.xlu0 %v37, 32
    %v71 = vpop.permute.xlu0 %70
    %72 = vrot.lane.b32.xlu0 %v38, 32
    %v73 = vpop.permute.xlu0 %72
    %78 = vrot.lane.b32.xlu0 %v39, 64
    %v79 = vpop.permute.xlu0 %78
    %80 = vrot.lane.b32.xlu0 %v40, 64
    %v81 = vpop.permute.xlu0 %80
    %86 = vrot.lane.b32.xlu0 %v41, 96
    %v87 = vpop.permute.xlu0 %86
    %88 = vrot.lane.b32.xlu0 %v42, 96
    %v89 = vpop.permute.xlu0 %88
    %vm92 = vcmask 261120
    %v93 = vsel %vm92, %v27, %v47
    %v94 = vsel %vm92, %v28, %v49
    %vm95 = vcmask 523264
    %v96 = vsel %vm95, %v93, %v55
    %v97 = vsel %vm95, %v94, %v57
    %vm98 = vcmask 785408
    %v99 = vsel %vm98, %v96, %v63
    %v100 = vsel %vm98, %v97, %v65
    %v101 = vsel %vm92, %v35, %v71
    %v102 = vsel %vm92, %v36, %v73
    %v103 = vsel %vm95, %v101, %v79
    %v104 = vsel %vm95, %v102, %v81
    %v105 = vsel %vm98, %v103, %v87
    %v106 = vsel %vm98, %v104, %v89
    %s107 = scalar_lea.vmem %s0, 24
    %v108 = vld [vmem:[%s107] sm:$0xff]
    %v109 = vld [vmem:[%s107 + $0x8] sm:$0xff]
    %v110 = vld [vmem:[%s107 + $0x1] sm:$0xff]
    %v111 = vld [vmem:[%s107 + $0x9] sm:$0xff]
    %v112 = vld [vmem:[%s107 + $0x2] sm:$0xff]
    %v113 = vld [vmem:[%s107 + $0xa] sm:$0xff]
    %v114 = vld [vmem:[%s107 + $0x3] sm:$0xff]
    %v115 = vld [vmem:[%s107 + $0xb] sm:$0xff]
    %v116 = vld [vmem:[%s107 + $0x4] sm:$0xff]
    %v117 = vld [vmem:[%s107 + $0xc] sm:$0xff]
    %v118 = vld [vmem:[%s107 + $0x5] sm:$0xff]
    %v119 = vld [vmem:[%s107 + $0xd] sm:$0xff]
    %v120 = vld [vmem:[%s107 + $0x6] sm:$0xff]
    %v121 = vld [vmem:[%s107 + $0xe] sm:$0xff]
    %v122 = vld [vmem:[%s107 + $0x7] sm:$0xff]
    %v123 = vld [vmem:[%s107 + $0xf] sm:$0xff]
    %v124 = vld [vmem:[%s107 + $0x10] sm:$0xff]
    %127 = vrot.lane.b32.xlu0 %v110, 32
    %v128 = vpop.permute.xlu0 %127
    %129 = vrot.lane.b32.xlu0 %v111, 32
    %v130 = vpop.permute.xlu0 %129
    %135 = vrot.lane.b32.xlu0 %v112, 64
    %v136 = vpop.permute.xlu0 %135
    %137 = vrot.lane.b32.xlu0 %v113, 64
    %v138 = vpop.permute.xlu0 %137
    %143 = vrot.lane.b32.xlu0 %v114, 96
    %v144 = vpop.permute.xlu0 %143
    %145 = vrot.lane.b32.xlu0 %v115, 96
    %v146 = vpop.permute.xlu0 %145
    %151 = vrot.lane.b32.xlu0 %v118, 32
    %v152 = vpop.permute.xlu0 %151
    %153 = vrot.lane.b32.xlu0 %v119, 32
    %v154 = vpop.permute.xlu0 %153
    %159 = vrot.lane.b32.xlu0 %v120, 64
    %v160 = vpop.permute.xlu0 %159
    %161 = vrot.lane.b32.xlu0 %v121, 64
    %v162 = vpop.permute.xlu0 %161
    %167 = vrot.lane.b32.xlu0 %v122, 96
    %v168 = vpop.permute.xlu0 %167
    %169 = vrot.lane.b32.xlu0 %v123, 96
    %v170 = vpop.permute.xlu0 %169
    %v173 = vsel %vm92, %v108, %v128
    %v174 = vsel %vm92, %v109, %v130
    %v175 = vsel %vm95, %v173, %v136
    %v176 = vsel %vm95, %v174, %v138
    %v177 = vsel %vm98, %v175, %v144
    %v178 = vsel %vm98, %v176, %v146
    %v179 = vsel %vm92, %v116, %v152
    %v180 = vsel %vm92, %v117, %v154
    %v181 = vsel %vm95, %v179, %v160
    %v182 = vsel %vm95, %v180, %v162
    %v183 = vsel %vm98, %v181, %v168
    %v184 = vsel %vm98, %v182, %v170
    %v185 = vld [vmem:[%s1] sm:$0xff]
    %v186 = vld [vmem:[%s1 + $0x8] sm:$0xff]
    %v187 = vld [vmem:[%s1 + $0x10] sm:$0xff]
    %v188 = vld [vmem:[%s1 + $0x18] sm:$0xff]
    %v189 = vld [vmem:[%s1 + $0x20] sm:$0xff]
    %v190 = vld [vmem:[%s1 + $0x28] sm:$0xff]
    %v191 = vld [vmem:[%s1 + $0x30] sm:$0xff]
    %v192 = vld [vmem:[%s1 + $0x38] sm:$0xff]
    %v193 = vld [vmem:[%s1 + $0x40] sm:$0xff]
    %v194 = vld [vmem:[%s1 + $0x48] sm:$0xff]
    %v195 = vld [vmem:[%s1 + $0x50] sm:$0xff]
    %v196 = vld [vmem:[%s1 + $0x58] sm:$0xff]
    %v197 = vld [vmem:[%s1 + $0x60] sm:$0xff]
    %v198 = vld [vmem:[%s1 + $0x68] sm:$0xff]
    %v199 = vld [vmem:[%s1 + $0x70] sm:$0xff]
    %v200 = vld [vmem:[%s1 + $0x78] sm:$0xff]
    %v201 = vld [vmem:[%s1 + $0x80] sm:$0xff]
    %v202 = vld [vmem:[%s1 + $0x88] sm:$0xff]
    %v203 = vld [vmem:[%s1 + $0x90] sm:$0xff]
    %v204 = vld [vmem:[%s1 + $0x98] sm:$0xff]
    %v205 = vld [vmem:[%s1 + $0xa0] sm:$0xff]
    %v206 = vld [vmem:[%s1 + $0xa8] sm:$0xff]
    %v207 = vld [vmem:[%s1 + $0xb0] sm:$0xff]
    %v208 = vld [vmem:[%s1 + $0xb8] sm:$0xff]
    %v209 = vld [vmem:[%s1 + $0xc0] sm:$0xff]
    %v210 = vld [vmem:[%s1 + $0xc8] sm:$0xff]
    %v211 = vld [vmem:[%s1 + $0xd0] sm:$0xff]
    %v212 = vld [vmem:[%s1 + $0xd8] sm:$0xff]
    %v213 = vld [vmem:[%s1 + $0xe0] sm:$0xff]
    %v214 = vld [vmem:[%s1 + $0xe8] sm:$0xff]
    %v215 = vld [vmem:[%s1 + $0xf0] sm:$0xff]
    %v216 = vld [vmem:[%s1 + $0xf8] sm:$0xff]
    %v217 = vld [vmem:[%s1 + $0x100] sm:$0xff]
    %v218 = vld [vmem:[%s1 + $0x108] sm:$0xff]
    %v219 = vld [vmem:[%s1 + $0x110] sm:$0xff]
    %v220 = vld [vmem:[%s1 + $0x118] sm:$0xff]
    %v221 = vld [vmem:[%s2] sm:$0x1]
    %v223 = vlaneseq
    %v224 = vshrl.u32 %v223, 7
    %v225 = vsub.s32 0, %v224
    %v226 = vrot.slane %v221, %v225
    %v229 = vsel %vm92, %v28, 0
    %v232 = vsel %vm92, %v43, 0
    %v235 = vsel %vm92, %v109, 0
    %v238 = vsel %vm92, %v124, 0
    %240 = vmatprep.subr.mxu0 0.0
    %241 = vmatpush1.msra.mxu0 %v185
    %242 = vmatprep.subr.mxu0 0.0
    %243 = vmatpush1.msra.mxu0 %v186
    %244 = vmatprep.subr.mxu0 0.0
    %245 = vmatpush1.msra.mxu0 %v187
    %246 = vmatprep.subr.mxu0 0.0
    %247 = vmatpush1.msra.mxu0 %v188
    %248 = vmatprep.subr.mxu0 0.0
    %249 = vmatpush1.msra.mxu0 %v189
    %250 = vmatprep.subr.mxu0 0.0
    %251 = vmatpush1.msra.mxu0 %v190
    %252 = vmatprep.subr.mxu0 0.0
    %253 = vmatpush1.msra.mxu0 %v191
    %254 = vmatprep.subr.mxu0 0.0
    %255 = vmatpush1.msra.mxu0 %v192
    %256 = vmatprep.subr.mxu0 0.0
    %257 = vmatpush1.msra.mxu0 %v193
    %258 = vmatprep.subr.mxu0 0.0
    %259 = vmatpush1.msra.mxu0 %v194
    %260 = vmatprep.subr.mxu0 0.0
    %261 = vmatpush1.msra.mxu0 %v195
    %262 = vmatprep.subr.mxu0 0.0
    %263 = vmatpush1.msra.mxu0 %v196
    %264 = vmatprep.subr.mxu0 0.0
    %265 = vmatpush1.msra.mxu0 %v197
    %266 = vmatprep.subr.mxu0 0.0
    %267 = vmatpush1.msra.mxu0 %v198
    %268 = vmatprep.subr.mxu0 0.0
    %269 = vmatpush1.msra.mxu0 %v199
    %270 = vmatprep.subr.mxu0 0.0
    %271 = vmatpush1.msra.mxu0 %v200
    %272 = vmatprep.subr.mxu0 0.0
    %273 = vmatpush1.msra.mxu0 %v201
    %274 = vmatprep.subr.mxu0 0.0
    %275 = vmatpush1.msra.mxu0 %v202
    %276 = vmatprep.subr.mxu0 0.0
    %277 = vmatpush1.msra.mxu0 %v203
    %278 = vmatprep.subr.mxu0 0.0
    %279 = vmatpush1.msra.mxu0 %v204
    %280 = vmatprep.subr.mxu0 0.0
    %281 = vmatpush1.msra.mxu0 %v205
    %282 = vmatprep.subr.mxu0 0.0
    %283 = vmatpush1.msra.mxu0 %v206
    %284 = vmatprep.subr.mxu0 0.0
    %285 = vmatpush1.msra.mxu0 %v207
    %286 = vmatprep.subr.mxu0 0.0
    %287 = vmatpush1.msra.mxu0 %v208
    %288 = vmatprep.subr.mxu0 0.0
    %289 = vmatpush1.msra.mxu0 %v209
    %290 = vmatprep.subr.mxu0 0.0
    %291 = vmatpush1.msra.mxu0 %v210
    %292 = vmatprep.subr.mxu0 0.0
    %293 = vmatpush1.msra.mxu0 %v211
    %294 = vmatprep.subr.mxu0 0.0
    %295 = vmatpush1.msra.mxu0 %v212
    %296 = vmatprep.subr.mxu0 0.0
    %297 = vmatpush1.msra.mxu0 %v213
    %298 = vmatprep.subr.mxu0 0.0
    %299 = vmatpush1.msra.mxu0 %v214
    %300 = vmatprep.subr.mxu0 0.0
    %301 = vmatpush1.msra.mxu0 %v215
    %302 = vmatprep.subr.mxu0 0.0
    %303 = vmatpush1.msra.mxu0 %v216
    %304 = vmatprep.mubr.f32.mxu0 %v105
    %305 = vmatmul.mubr.f32.gmra.mrb[0].mxu0 %v99
    %v306 = vpop.f32.mrb[0].mxu0
    %v307 = vadd.f32 %v226, %v306
    %v308 = vpop.f32.mrb[0].mxu0
    %309 = vmatprep.mubr.f32.mxu0 %v106
    %310 = vmatmul.mubr.f32.gmra.mrb[0].mxu0 %v100
    %v311 = vpop.f32.mrb[0].mxu0
    %v312 = vadd.f32 %v226, %v311
    %v313 = vpop.f32.mrb[0].mxu0
    %314 = vmatprep.mubr.f32.mxu0 %v183
    %315 = vmatmul.mubr.f32.gmra.mrb[0].mxu0 %v177
    %v316 = vpop.f32.mrb[0].mxu0
    %v317 = vadd.f32 %v226, %v316
    %v318 = vpop.f32.mrb[0].mxu0
    %319 = vmatprep.mubr.f32.mxu0 %v184
    %320 = vmatmul.mubr.f32.gmra.mrb[0].mxu0 %v178
    %v321 = vpop.f32.mrb[0].mxu0
    %v322 = vadd.f32 %v226, %v321
    %v323 = vpop.f32.mrb[0].mxu0
    %324 = vdwg.mxu0
    %325 = vmatprep.subr.mxu0 0.0
    %326 = vmatpush1.msra.mxu0 %v217
    %327 = vmatprep.subr.mxu0 0.0
    %328 = vmatpush1.msra.mxu0 %v218
    %329 = vmatprep.subr.mxu0 0.0
    %330 = vmatpush1.msra.mxu0 %v219
    %331 = vmatprep.subr.mxu0 0.0
    %332 = vmatpush1.msra.mxu0 %v220
    %333 = vmatprep.subr.mxu0 0.0
    %334 = vmatpush1.msra.mxu0 0.0
    %335 = vmatprep.subr.mxu0 0.0
    %336 = vmatpush1.msra.mxu0 0.0
    %337 = vmatprep.subr.mxu0 0.0
    %338 = vmatpush1.msra.mxu0 0.0
    %339 = vmatprep.subr.mxu0 0.0
    %340 = vmatpush1.msra.mxu0 0.0
    %341 = vmatprep.subr.mxu0 0.0
    %342 = vmatpush1.msra.mxu0 0.0
    %343 = vmatprep.subr.mxu0 0.0
    %344 = vmatpush1.msra.mxu0 0.0
    %345 = vmatprep.subr.mxu0 0.0
    %346 = vmatpush1.msra.mxu0 0.0
    %347 = vmatprep.subr.mxu0 0.0
    %348 = vmatpush1.msra.mxu0 0.0
    %349 = vmatprep.subr.mxu0 0.0
    %350 = vmatpush1.msra.mxu0 0.0
    %351 = vmatprep.subr.mxu0 0.0
    %352 = vmatpush1.msra.mxu0 0.0
    %353 = vmatprep.subr.mxu0 0.0
    %354 = vmatpush1.msra.mxu0 0.0
    %355 = vmatprep.subr.mxu0 0.0
    %356 = vmatpush1.msra.mxu0 0.0
    %357 = vmatprep.subr.mxu0 0.0
    %358 = vmatpush1.msra.mxu0 0.0
    %359 = vmatprep.subr.mxu0 0.0
    %360 = vmatpush1.msra.mxu0 0.0
    %361 = vmatprep.subr.mxu0 0.0
    %362 = vmatpush1.msra.mxu0 0.0
    %363 = vmatprep.subr.mxu0 0.0
    %364 = vmatpush1.msra.mxu0 0.0
    %365 = vmatprep.subr.mxu0 0.0
    %366 = vmatpush1.msra.mxu0 0.0
    %367 = vmatprep.subr.mxu0 0.0
    %368 = vmatpush1.msra.mxu0 0.0
    %369 = vmatprep.subr.mxu0 0.0
    %370 = vmatpush1.msra.mxu0 0.0
    %371 = vmatprep.subr.mxu0 0.0
    %372 = vmatpush1.msra.mxu0 0.0
    %373 = vmatprep.subr.mxu0 0.0
    %374 = vmatpush1.msra.mxu0 0.0
    %375 = vmatprep.subr.mxu0 0.0
    %376 = vmatpush1.msra.mxu0 0.0
    %377 = vmatprep.subr.mxu0 0.0
    %378 = vmatpush1.msra.mxu0 0.0
    %379 = vmatprep.subr.mxu0 0.0
    %380 = vmatpush1.msra.mxu0 0.0
    %381 = vmatprep.subr.mxu0 0.0
    %382 = vmatpush1.msra.mxu0 0.0
    %383 = vmatprep.subr.mxu0 0.0
    %384 = vmatpush1.msra.mxu0 0.0
    %385 = vmatprep.subr.mxu0 0.0
    %386 = vmatpush1.msra.mxu0 0.0
    %387 = vmatprep.subr.mxu0 0.0
    %388 = vmatpush1.msra.mxu0 0.0
    %389 = vmatprep.mubr.f32.mxu0 0.0
    %390 = vmatmul.mubr.f32.gmra.mrb[0].mxu0 %v229
    %v391 = vpop.f32.mrb[0].mxu0
    %v392 = vadd.f32 %v307, %v391
    %v393 = vpop.f32.mrb[0].mxu0
    %394 = vmatprep.mubr.f32.mxu0 0.0
    %395 = vmatmul.mubr.f32.gmra.mrb[0].mxu0 %v232
    %v396 = vpop.f32.mrb[0].mxu0
    %v397 = vadd.f32 %v312, %v396
    %v398 = vpop.f32.mrb[0].mxu0
    %399 = vmatprep.mubr.f32.mxu0 0.0
    %400 = vmatmul.mubr.f32.gmra.mrb[0].mxu0 %v235
    %v401 = vpop.f32.mrb[0].mxu0
    %v402 = vadd.f32 %v317, %v401
    %v403 = vpop.f32.mrb[0].mxu0
    %404 = vmatprep.mubr.f32.mxu0 0.0
    %405 = vmatmul.mubr.f32.gmra.mrb[0].mxu0 %v238
    %v406 = vpop.f32.mrb[0].mxu0
    %v407 = vadd.f32 %v322, %v406
    %v408 = vpop.f32.mrb[0].mxu0
    %409 = vdwg.mxu0
    %vm410 = vcmask 523520
    %v411 = vsel %vm410, %v392, -inf
    %v412 = vsel %vm410, %v397, -inf
    %v413 = vmax.f32 %v411, %v412
    %v414 = vrot.slane %v413, 4
    %v415 = vmax.f32 %v413, %v414
    %v416 = vrot.slane %v415, 2
    %v417 = vmax.f32 %v415, %v416
    %v418 = vrot.slane %v417, 1
    %v419 = vmax.f32 %v417, %v418
    %v420 = vsub.f32 %v392, %v419
    %v421 = vsub.f32 %v397, %v419
    %v422 = vmul.f32 %v420, 1.442695
    %v423 = vpow.pop %v422
    %v424 = vmul.f32 %v421, 1.442695
    %v425 = vpow.pop %v424
    %v426 = vsel %vm410, %v423, 0.0
    %v427 = vsel %vm410, %v425, 0.0
    %v428 = vadd.f32 %v426, %v427
    %v429 = vrot.slane %v428, 4
    %v430 = vadd.f32 %v428, %v429
    %v431 = vrot.slane %v430, 2
    %v432 = vadd.f32 %v430, %v431
    %v433 = vrot.slane %v432, 1
    %v434 = vadd.f32 %v432, %v433
    %v435 = vrcp.pop %v434
    %v436 = vmul.f32 %v423, %v435
    %v437 = vmul.f32 %v425, %v435
    %440 = vrot.lane.b32.xlu0 %v436, 96
    %v441 = vpop.permute.xlu0 %440
    %442 = vrot.lane.b32.xlu0 %v437, 96
    %v443 = vpop.permute.xlu0 %442
    %v446 = vmul.f32 %v392, %v441
    %v447 = vmul.f32 %v397, %v443
    %v448 = vsel %vm92, %v446, 0.0
    %v449 = vsel %vm92, %v447, 0.0
    %v450 = vadd.f32 %v448, %v449
    %v451 = vrot.slane %v450, 4
    %v452 = vadd.f32 %v450, %v451
    %v453 = vrot.slane %v452, 2
    %v454 = vadd.f32 %v452, %v453
    %v455 = vrot.slane %v454, 1
    %v456 = vadd.f32 %v454, %v455
    %v457 = vsel %vm92, %v392, -inf
    %v458 = vsel %vm92, %v397, -inf
    %v459 = vmax.f32 %v457, %v458
    %v460 = vrot.slane %v459, 4
    %v461 = vmax.f32 %v459, %v460
    %v462 = vrot.slane %v461, 2
    %v463 = vmax.f32 %v461, %v462
    %v464 = vrot.slane %v463, 1
    %v465 = vmax.f32 %v463, %v464
    %467 = vrot.lane.b32.xlu0 %v465, 32
    %v468 = vpop.permute.xlu0 %467
    %v470 = vsel %vm92, %v456, %v468
    %v471 = vsel %vm410, %v402, -inf
    %v472 = vsel %vm410, %v407, -inf
    %v473 = vmax.f32 %v471, %v472
    %v474 = vrot.slane %v473, 4
    %v475 = vmax.f32 %v473, %v474
    %v476 = vrot.slane %v475, 2
    %v477 = vmax.f32 %v475, %v476
    %v478 = vrot.slane %v477, 1
    %v479 = vmax.f32 %v477, %v478
    %v480 = vsub.f32 %v402, %v479
    %v481 = vsub.f32 %v407, %v479
    %v482 = vmul.f32 %v480, 1.442695
    %v483 = vpow.pop %v482
    %v484 = vmul.f32 %v481, 1.442695
    %v485 = vpow.pop %v484
    %v486 = vsel %vm410, %v483, 0.0
    %v487 = vsel %vm410, %v485, 0.0
    %v488 = vadd.f32 %v486, %v487
    %v489 = vrot.slane %v488, 4
    %v490 = vadd.f32 %v488, %v489
    %v491 = vrot.slane %v490, 2
    %v492 = vadd.f32 %v490, %v491
    %v493 = vrot.slane %v492, 1
    %v494 = vadd.f32 %v492, %v493
    %v495 = vrcp.pop %v494
    %v496 = vmul.f32 %v483, %v495
    %v497 = vmul.f32 %v485, %v495
    %500 = vrot.lane.b32.xlu0 %v496, 96
    %v501 = vpop.permute.xlu0 %500
    %502 = vrot.lane.b32.xlu0 %v497, 96
    %v503 = vpop.permute.xlu0 %502
    %v506 = vmul.f32 %v402, %v501
    %v507 = vmul.f32 %v407, %v503
    %v508 = vsel %vm92, %v506, 0.0
    %v509 = vsel %vm92, %v507, 0.0
    %v510 = vadd.f32 %v508, %v509
    %v511 = vrot.slane %v510, 4
    %v512 = vadd.f32 %v510, %v511
    %v513 = vrot.slane %v512, 2
    %v514 = vadd.f32 %v512, %v513
    %v515 = vrot.slane %v514, 1
    %v516 = vadd.f32 %v514, %v515
    %v517 = vsel %vm92, %v402, -inf
    %v518 = vsel %vm92, %v407, -inf
    %v519 = vmax.f32 %v517, %v518
    %v520 = vrot.slane %v519, 4
    %v521 = vmax.f32 %v519, %v520
    %v522 = vrot.slane %v521, 2
    %v523 = vmax.f32 %v521, %v522
    %v524 = vrot.slane %v523, 1
    %v525 = vmax.f32 %v523, %v524
    %527 = vrot.lane.b32.xlu0 %v525, 32
    %v528 = vpop.permute.xlu0 %527
    %v530 = vsel %vm92, %v516, %v528
    %v532 = vrot.slane %v530, 7
    %vm534 = vcmask 1040384
    %v535 = vsel %vm534, %v470, %v532
    %v536 = vld [vmem:[%s3] sm:$0xff]
    %v537 = vld [vmem:[%s3 + $0x8] sm:$0xff]
    %v538 = vld [vmem:[%s3 + $0x10] sm:$0xff]
    %v539 = vld [vmem:[%s3 + $0x18] sm:$0xff]
    %v540 = vld [vmem:[%s3 + $0x20] sm:$0xff]
    %v541 = vld [vmem:[%s3 + $0x28] sm:$0xff]
    %v542 = vld [vmem:[%s3 + $0x30] sm:$0xff]
    %v543 = vld [vmem:[%s3 + $0x38] sm:$0xff]
    %v544 = vld [vmem:[%s3 + $0x40] sm:$0xff]
    %v545 = vld [vmem:[%s3 + $0x48] sm:$0xff]
    %v546 = vld [vmem:[%s3 + $0x50] sm:$0xff]
    %v547 = vld [vmem:[%s3 + $0x58] sm:$0xff]
    %v548 = vld [vmem:[%s3 + $0x60] sm:$0xff]
    %v549 = vld [vmem:[%s3 + $0x68] sm:$0xff]
    %v550 = vld [vmem:[%s3 + $0x70] sm:$0xff]
    %v551 = vld [vmem:[%s3 + $0x78] sm:$0xff]
    %v552 = vld [vmem:[%s3 + $0x80] sm:$0xff]
    %v553 = vld [vmem:[%s3 + $0x88] sm:$0xff]
    %v554 = vld [vmem:[%s3 + $0x90] sm:$0xff]
    %v555 = vld [vmem:[%s3 + $0x98] sm:$0xff]
    %v556 = vld [vmem:[%s3 + $0xa0] sm:$0xff]
    %v557 = vld [vmem:[%s3 + $0xa8] sm:$0xff]
    %v558 = vld [vmem:[%s3 + $0xb0] sm:$0xff]
    %v559 = vld [vmem:[%s3 + $0xb8] sm:$0xff]
    %v560 = vld [vmem:[%s3 + $0xc0] sm:$0xff]
    %v561 = vld [vmem:[%s3 + $0xc8] sm:$0xff]
    %v562 = vld [vmem:[%s3 + $0xd0] sm:$0xff]
    %v563 = vld [vmem:[%s3 + $0xd8] sm:$0xff]
    %v564 = vld [vmem:[%s3 + $0xe0] sm:$0xff]
    %v565 = vld [vmem:[%s3 + $0xe8] sm:$0xff]
    %v566 = vld [vmem:[%s3 + $0xf0] sm:$0xff]
    %v567 = vld [vmem:[%s3 + $0xf8] sm:$0xff]
    %v568 = vld [vmem:[%s4] sm:$0xf]
    %v570 = vlaneseq
    %v571 = vshrl.u32 %v570, 7
    %v572 = vsub.s32 0, %v571
    %v573 = vrot.slane %v568, %v572
    %v574 = vlaneseq
    %v575 = vshrl.u32 %v574, 7
    %v576 = vsub.s32 1, %v575
    %v577 = vrot.slane %v568, %v576
    %v578 = vlaneseq
    %v579 = vshrl.u32 %v578, 7
    %v580 = vsub.s32 2, %v579
    %v581 = vrot.slane %v568, %v580
    %v582 = vlaneseq
    %v583 = vshrl.u32 %v582, 7
    %v584 = vsub.s32 3, %v583
    %v585 = vrot.slane %v568, %v584
    %v591 = vsel %vm95, %v535, 0
    %593 = vmatprep.subr.mxu0 %v537
    %594 = vmatpush1.msra.mxu0 %v536
    %595 = vmatprep.subr.mxu0 %v541
    %596 = vmatpush1.msra.mxu0 %v540
    %597 = vmatprep.subr.mxu0 %v545
    %598 = vmatpush1.msra.mxu0 %v544
    %599 = vmatprep.subr.mxu0 %v549
    %600 = vmatpush1.msra.mxu0 %v548
    %601 = vmatprep.subr.mxu0 %v553
    %602 = vmatpush1.msra.mxu0 %v552
    %603 = vmatprep.subr.mxu0 %v557
    %604 = vmatpush1.msra.mxu0 %v556
    %605 = vmatprep.subr.mxu0 %v561
    %606 = vmatpush1.msra.mxu0 %v560
    %607 = vmatprep.subr.mxu0 %v565
    %608 = vmatpush1.msra.mxu0 %v564
    %609 = vmatprep.subr.mxu0 0.0
    %610 = vmatpush1.msra.mxu0 0.0
    %611 = vmatprep.subr.mxu0 0.0
    %612 = vmatpush1.msra.mxu0 0.0
    %613 = vmatprep.subr.mxu0 0.0
    %614 = vmatpush1.msra.mxu0 0.0
    %615 = vmatprep.subr.mxu0 0.0
    %616 = vmatpush1.msra.mxu0 0.0
    %617 = vmatprep.subr.mxu0 0.0
    %618 = vmatpush1.msra.mxu0 0.0
    %619 = vmatprep.subr.mxu0 0.0
    %620 = vmatpush1.msra.mxu0 0.0
    %621 = vmatprep.subr.mxu0 0.0
    %622 = vmatpush1.msra.mxu0 0.0
    %623 = vmatprep.subr.mxu0 0.0
    %624 = vmatpush1.msra.mxu0 0.0
    %625 = vmatprep.subr.mxu0 0.0
    %626 = vmatpush1.msra.mxu0 0.0
    %627 = vmatprep.subr.mxu0 0.0
    %628 = vmatpush1.msra.mxu0 0.0
    %629 = vmatprep.subr.mxu0 0.0
    %630 = vmatpush1.msra.mxu0 0.0
    %631 = vmatprep.subr.mxu0 0.0
    %632 = vmatpush1.msra.mxu0 0.0
    %633 = vmatprep.subr.mxu0 0.0
    %634 = vmatpush1.msra.mxu0 0.0
    %635 = vmatprep.subr.mxu0 0.0
    %636 = vmatpush1.msra.mxu0 0.0
    %637 = vmatprep.subr.mxu0 0.0
    %638 = vmatpush1.msra.mxu0 0.0
    %639 = vmatprep.subr.mxu0 0.0
    %640 = vmatpush1.msra.mxu0 0.0
    %641 = vmatprep.subr.mxu0 0.0
    %642 = vmatpush1.msra.mxu0 0.0
    %643 = vmatprep.subr.mxu0 0.0
    %644 = vmatpush1.msra.mxu0 0.0
    %645 = vmatprep.subr.mxu0 0.0
    %646 = vmatpush1.msra.mxu0 0.0
    %647 = vmatprep.subr.mxu0 0.0
    %648 = vmatpush1.msra.mxu0 0.0
    %649 = vmatprep.subr.mxu0 0.0
    %650 = vmatpush1.msra.mxu0 0.0
    %651 = vmatprep.subr.mxu0 0.0
    %652 = vmatpush1.msra.mxu0 0.0
    %653 = vmatprep.subr.mxu0 0.0
    %654 = vmatpush1.msra.mxu0 0.0
    %655 = vmatprep.subr.mxu0 0.0
    %656 = vmatpush1.msra.mxu0 0.0
    %657 = vmatprep.mubr.f32.mxu0 0.0
    %658 = vmatmul.mubr.f32.gmra.mrb[0].mxu0 %v591
    %v659 = vpop.f32.mrb[0].mxu0
    %v660 = vadd.f32 %v573, %v659
    %v661 = vpop.f32.mrb[0].mxu0
    %v662 = vadd.f32 %v577, %v661
    %663 = vdwg.mxu0
    %664 = vmatprep.subr.mxu0 %v539
    %665 = vmatpush1.msra.mxu0 %v538
    %666 = vmatprep.subr.mxu0 %v543
    %667 = vmatpush1.msra.mxu0 %v542
    %668 = vmatprep.subr.mxu0 %v547
    %669 = vmatpush1.msra.mxu0 %v546
    %670 = vmatprep.subr.mxu0 %v551
    %671 = vmatpush1.msra.mxu0 %v550
    %672 = vmatprep.subr.mxu0 %v555
    %673 = vmatpush1.msra.mxu0 %v554
    %674 = vmatprep.subr.mxu0 %v559
    %675 = vmatpush1.msra.mxu0 %v558
    %676 = vmatprep.subr.mxu0 %v563
    %677 = vmatpush1.msra.mxu0 %v562
    %678 = vmatprep.subr.mxu0 %v567
    %679 = vmatpush1.msra.mxu0 %v566
    %680 = vmatprep.subr.mxu0 0.0
    %681 = vmatpush1.msra.mxu0 0.0
    %682 = vmatprep.subr.mxu0 0.0
    %683 = vmatpush1.msra.mxu0 0.0
    %684 = vmatprep.subr.mxu0 0.0
    %685 = vmatpush1.msra.mxu0 0.0
    %686 = vmatprep.subr.mxu0 0.0
    %687 = vmatpush1.msra.mxu0 0.0
    %688 = vmatprep.subr.mxu0 0.0
    %689 = vmatpush1.msra.mxu0 0.0
    %690 = vmatprep.subr.mxu0 0.0
    %691 = vmatpush1.msra.mxu0 0.0
    %692 = vmatprep.subr.mxu0 0.0
    %693 = vmatpush1.msra.mxu0 0.0
    %694 = vmatprep.subr.mxu0 0.0
    %695 = vmatpush1.msra.mxu0 0.0
    %696 = vmatprep.subr.mxu0 0.0
    %697 = vmatpush1.msra.mxu0 0.0
    %698 = vmatprep.subr.mxu0 0.0
    %699 = vmatpush1.msra.mxu0 0.0
    %700 = vmatprep.subr.mxu0 0.0
    %701 = vmatpush1.msra.mxu0 0.0
    %702 = vmatprep.subr.mxu0 0.0
    %703 = vmatpush1.msra.mxu0 0.0
    %704 = vmatprep.subr.mxu0 0.0
    %705 = vmatpush1.msra.mxu0 0.0
    %706 = vmatprep.subr.mxu0 0.0
    %707 = vmatpush1.msra.mxu0 0.0
    %708 = vmatprep.subr.mxu0 0.0
    %709 = vmatpush1.msra.mxu0 0.0
    %710 = vmatprep.subr.mxu0 0.0
    %711 = vmatpush1.msra.mxu0 0.0
    %712 = vmatprep.subr.mxu0 0.0
    %713 = vmatpush1.msra.mxu0 0.0
    %714 = vmatprep.subr.mxu0 0.0
    %715 = vmatpush1.msra.mxu0 0.0
    %716 = vmatprep.subr.mxu0 0.0
    %717 = vmatpush1.msra.mxu0 0.0
    %718 = vmatprep.subr.mxu0 0.0
    %719 = vmatpush1.msra.mxu0 0.0
    %720 = vmatprep.subr.mxu0 0.0
    %721 = vmatpush1.msra.mxu0 0.0
    %722 = vmatprep.subr.mxu0 0.0
    %723 = vmatpush1.msra.mxu0 0.0
    %724 = vmatprep.subr.mxu0 0.0
    %725 = vmatpush1.msra.mxu0 0.0
    %726 = vmatprep.subr.mxu0 0.0
    %727 = vmatpush1.msra.mxu0 0.0
    %728 = vmatprep.mubr.f32.mxu0 0.0
    %729 = vmatmul.mubr.f32.gmra.mrb[0].mxu0 %v591
    %v730 = vpop.f32.mrb[0].mxu0
    %v731 = vadd.f32 %v581, %v730
    %v732 = vpop.f32.mrb[0].mxu0
    %v733 = vadd.f32 %v585, %v732
    %734 = vdwg.mxu0
    %v735 = vmax.f32 %v660, 0.0
    %v736 = vmax.f32 %v662, 0.0
    %v737 = vmax.f32 %v731, 0.0
    %v738 = vmax.f32 %v733, 0.0
    %v739 = vld [vmem:[%s5] sm:$0xff]
    %v740 = vld [vmem:[%s5 + $0x8] sm:$0xff]
    %v741 = vld [vmem:[%s6] sm:$0x1]
    %v743 = vlaneseq
    %v744 = vshrl.u32 %v743, 7
    %v745 = vsub.s32 0, %v744
    %v746 = vrot.slane %v741, %v745
    %v750 = vcombine.high %v739, %v739
    %v751 = vcombine.high %v740, %v740
    %754 = vmatprep.subr.mxu0 %v750
    %755 = vmatpush1.xpose.msra.mxu0 %v739
    %756 = vmatprep.subr.mxu0 0.0
    %757 = vmatpush1.xpose.msra.mxu0 0.0
    %758 = vmatprep.subr.mxu0 0.0
    %759 = vmatpush1.xpose.msra.mxu0 0.0
    %760 = vmatprep.subr.mxu0 0.0
    %761 = vmatpush1.xpose.msra.mxu0 0.0
    %762 = vmatprep.subr.mxu0 0.0
    %763 = vmatpush1.xpose.msra.mxu0 0.0
    %764 = vmatprep.subr.mxu0 0.0
    %765 = vmatpush1.xpose.msra.mxu0 0.0
    %766 = vmatprep.subr.mxu0 0.0
    %767 = vmatpush1.xpose.msra.mxu0 0.0
    %768 = vmatprep.subr.mxu0 0.0
    %769 = vmatpush1.xpose.msra.mxu0 0.0
    %770 = vmatprep.subr.mxu0 0.0
    %771 = vmatpush1.xpose.msra.mxu0 0.0
    %772 = vmatprep.subr.mxu0 0.0
    %773 = vmatpush1.xpose.msra.mxu0 0.0
    %774 = vmatprep.subr.mxu0 0.0
    %775 = vmatpush1.xpose.msra.mxu0 0.0
    %776 = vmatprep.subr.mxu0 0.0
    %777 = vmatpush1.xpose.msra.mxu0 0.0
    %778 = vmatprep.subr.mxu0 0.0
    %779 = vmatpush1.xpose.msra.mxu0 0.0
    %780 = vmatprep.subr.mxu0 0.0
    %781 = vmatpush1.xpose.msra.mxu0 0.0
    %782 = vmatprep.subr.mxu0 0.0
    %783 = vmatpush1.xpose.msra.mxu0 0.0
    %784 = vmatprep.subr.mxu0 0.0
    %785 = vmatpush1.xpose.msra.mxu0 0.0
    %786 = vmatprep.subr.mxu0 0.0
    %787 = vmatpush1.xpose.msra.mxu0 0.0
    %788 = vmatprep.subr.mxu0 0.0
    %789 = vmatpush1.xpose.msra.mxu0 0.0
    %790 = vmatprep.subr.mxu0 0.0
    %791 = vmatpush1.xpose.msra.mxu0 0.0
    %792 = vmatprep.subr.mxu0 0.0
    %793 = vmatpush1.xpose.msra.mxu0 0.0
    %794 = vmatprep.subr.mxu0 0.0
    %795 = vmatpush1.xpose.msra.mxu0 0.0
    %796 = vmatprep.subr.mxu0 0.0
    %797 = vmatpush1.xpose.msra.mxu0 0.0
    %798 = vmatprep.subr.mxu0 0.0
    %799 = vmatpush1.xpose.msra.mxu0 0.0
    %800 = vmatprep.subr.mxu0 0.0
    %801 = vmatpush1.xpose.msra.mxu0 0.0
    %802 = vmatprep.subr.mxu0 0.0
    %803 = vmatpush1.xpose.msra.mxu0 0.0
    %804 = vmatprep.subr.mxu0 0.0
    %805 = vmatpush1.xpose.msra.mxu0 0.0
    %806 = vmatprep.subr.mxu0 0.0
    %807 = vmatpush1.xpose.msra.mxu0 0.0
    %808 = vmatprep.subr.mxu0 0.0
    %809 = vmatpush1.xpose.msra.mxu0 0.0
    %810 = vmatprep.subr.mxu0 0.0
    %811 = vmatpush1.xpose.msra.mxu0 0.0
    %812 = vmatprep.subr.mxu0 0.0
    %813 = vmatpush1.xpose.msra.mxu0 0.0
    %814 = vmatprep.subr.mxu0 0.0
    %815 = vmatpush1.xpose.msra.mxu0 0.0
    %816 = vmatprep.subr.mxu0 0.0
    %817 = vmatpush1.xpose.msra.mxu0 0.0
    %818 = vmatprep.mubr.f32.mxu0 %v736
    %819 = vmatmul.mubr.f32.gmra.mrb[0].mxu0 %v735
    %v820 = vpop.f32.mrb[0].mxu0
    %v821 = vadd.f32 %v746, %v820
    %v822 = vpop.f32.mrb[0].mxu0
    %823 = vdwg.mxu0
    %824 = vmatprep.subr.mxu0 %v751
    %825 = vmatpush1.xpose.msra.mxu0 %v740
    %826 = vmatprep.subr.mxu0 0.0
    %827 = vmatpush1.xpose.msra.mxu0 0.0
    %828 = vmatprep.subr.mxu0 0.0
    %829 = vmatpush1.xpose.msra.mxu0 0.0
    %830 = vmatprep.subr.mxu0 0.0
    %831 = vmatpush1.xpose.msra.mxu0 0.0
    %832 = vmatprep.subr.mxu0 0.0
    %833 = vmatpush1.xpose.msra.mxu0 0.0
    %834 = vmatprep.subr.mxu0 0.0
    %835 = vmatpush1.xpose.msra.mxu0 0.0
    %836 = vmatprep.subr.mxu0 0.0
    %837 = vmatpush1.xpose.msra.mxu0 0.0
    %838 = vmatprep.subr.mxu0 0.0
    %839 = vmatpush1.xpose.msra.mxu0 0.0
    %840 = vmatprep.subr.mxu0 0.0
    %841 = vmatpush1.xpose.msra.mxu0 0.0
    %842 = vmatprep.subr.mxu0 0.0
    %843 = vmatpush1.xpose.msra.mxu0 0.0
    %844 = vmatprep.subr.mxu0 0.0
    %845 = vmatpush1.xpose.msra.mxu0 0.0
    %846 = vmatprep.subr.mxu0 0.0
    %847 = vmatpush1.xpose.msra.mxu0 0.0
    %848 = vmatprep.subr.mxu0 0.0
    %849 = vmatpush1.xpose.msra.mxu0 0.0
    %850 = vmatprep.subr.mxu0 0.0
    %851 = vmatpush1.xpose.msra.mxu0 0.0
    %852 = vmatprep.subr.mxu0 0.0
    %853 = vmatpush1.xpose.msra.mxu0 0.0
    %854 = vmatprep.subr.mxu0 0.0
    %855 = vmatpush1.xpose.msra.mxu0 0.0
    %856 = vmatprep.subr.mxu0 0.0
    %857 = vmatpush1.xpose.msra.mxu0 0.0
    %858 = vmatprep.subr.mxu0 0.0
    %859 = vmatpush1.xpose.msra.mxu0 0.0
    %860 = vmatprep.subr.mxu0 0.0
    %861 = vmatpush1.xpose.msra.mxu0 0.0
    %862 = vmatprep.subr.mxu0 0.0
    %863 = vmatpush1.xpose.msra.mxu0 0.0
    %864 = vmatprep.subr.mxu0 0.0
    %865 = vmatpush1.xpose.msra.mxu0 0.0
    %866 = vmatprep.subr.mxu0 0.0
    %867 = vmatpush1.xpose.msra.mxu0 0.0
    %868 = vmatprep.subr.mxu0 0.0
    %869 = vmatpush1.xpose.msra.mxu0 0.0
    %870 = vmatprep.subr.mxu0 0.0
    %871 = vmatpush1.xpose.msra.mxu0 0.0
    %872 = vmatprep.subr.mxu0 0.0
    %873 = vmatpush1.xpose.msra.mxu0 0.0
    %874 = vmatprep.subr.mxu0 0.0
    %875 = vmatpush1.xpose.msra.mxu0 0.0
    %876 = vmatprep.subr.mxu0 0.0
    %877 = vmatpush1.xpose.msra.mxu0 0.0
    %878 = vmatprep.subr.mxu0 0.0
    %879 = vmatpush1.xpose.msra.mxu0 0.0
    %880 = vmatprep.subr.mxu0 0.0
    %881 = vmatpush1.xpose.msra.mxu0 0.0
    %882 = vmatprep.subr.mxu0 0.0
    %883 = vmatpush1.xpose.msra.mxu0 0.0
    %884 = vmatprep.subr.mxu0 0.0
    %885 = vmatpush1.xpose.msra.mxu0 0.0
    %886 = vmatprep.subr.mxu0 0.0
    %887 = vmatpush1.xpose.msra.mxu0 0.0
    %888 = vmatprep.mubr.f32.mxu0 %v738
    %889 = vmatmul.mubr.f32.gmra.mrb[0].mxu0 %v737
    %v890 = vpop.f32.mrb[0].mxu0
    %v891 = vadd.f32 %v821, %v890
    %v892 = vpop.f32.mrb[0].mxu0
    %893 = vdwg.mxu0
    %vm894 = vcmask 25600
    %895 = vst.msk [vmem:[#allocation2] sm:$0x3] %vm894, %v891
    // Predicated region
    $region30: #{tpu_custom_call.1} parent=1 // pred_check
      _
    $region31: #{tpu_custom_call.1} parent=1 // pred_check_branch
      %897 = sbr.rel (0) target = $region33
    $region32: #{tpu_custom_call.1} parent=1 // pred_region
      %s899 = ssub.s32 32, 32
      %900 = vsyncadd [#allocation3], %s899
      %s902 = sshll.u32 [#allocation2], 4
      %s903 = int_to_ptr.vmem [resolvable:$true] %s902
      %905 = dma.vmem_to_hbm [thread:$0]  %s903, 32, %s7, [#allocation3]
    $region33: #{tpu_custom_call.1} parent=1 // pred_fallthru
      _
    // Predicated region
    $region34: #{tpu_custom_call.1} parent=1 // pred_check
      _
    $region35: #{tpu_custom_call.1} parent=1 // pred_check_branch
      %907 = sbr.rel (0) target = $region37
    $region36: #{tpu_custom_call.1} parent=1 // pred_region
      %908 = dma.done [#allocation3], 32
    $region37: #{tpu_custom_call.1} parent=1 // pred_fallthru
      _
    %909 = vsyncpa [#allocation3], 1

</llo_original>
